<compile_context>
chip_gen: v7x
topology: tpu7x:2x2x1
jax: 0.10.0
libtpu: 0.0.40
codegen_flags: <defaults>
</compile_context>

<pallas_src>
import functools
import math

import jax
import jax.numpy as jnp
import numpy as np
from jax import lax
from jax.experimental import pallas as pl
from jax.experimental.pallas import tpu as pltpu

# Blade indices with non-degenerate metric (do not contain e0).
_INNER_BLADE_IDX = (0, 2, 3, 4, 8, 9, 10, 14)


def _round_up(v, m):
    return ((v + m - 1) // m) * m


def _num_tensorcores():
    """Best-effort TensorCore count (v7x has 2/chip); never raises."""
    try:
        info = pltpu.get_tpu_info()
        for attr in ("num_cores", "core_count", "num_tensorcores", "tensorcore_count"):
            v = getattr(info, attr, None)
            if isinstance(v, int) and 0 < v <= 16:
                return v
    except Exception:
        pass
    try:
        kind = jax.devices()[0].device_kind.lower()
        if "v7" in kind or "7x" in kind:
            return 2
    except Exception:
        pass
    return 1


def _kernel_body(x_ref, bmask_ref, wsel_ref, o_ref, *, eps, k):
    # x_ref: (tn, k*D) lane-dense tile holding k logical rows per slab row.
    # bmask_ref: (k, k*D) — segment-restricted blade mask, pre-scaled by 1/C.
    # wsel_ref:  (k, k*D) — segment-restricted channel weights (or None).
    xf = x_ref[...].astype(jnp.float32)           # single load of x
    sq = xf * xf
    bm = bmask_ref[...]
    ws = wsel_ref[...] if wsel_ref is not None else None

    scale = None
    for s in range(k):                            # static, k <= 8 (usually 1 or 2)
        # Per-segment: sum over blades AND channels of one logical row; the
        # 1/C baked into bm turns the channel-sum into the channel-mean.
        ms = jnp.sum(sq * bm[s:s + 1, :], axis=-1, keepdims=True)   # (tn, 1)
        inv = lax.rsqrt(ms + eps)                                   # EUP slot
        term = inv * ws[s:s + 1, :] if ws is not None else inv
        scale = term if scale is None else scale + term

    # f32 compute throughout; single rounding at the store.
    o_ref[...] = (xf * scale).astype(o_ref.dtype)


def equi_rms_norm_pallas(x, weight=None, eps=None, *, target_block_bytes=4 << 20):
    """x: (..., C, 16). weight: (C,) or None (channelwise_rescale). Same shape/dtype out."""
    if x.shape[-1] != 16:
        raise ValueError("last dim must be 16 (PGA multi-vector blades)")
    orig_shape = x.shape
    C = orig_shape[-2]
    D = C * 16
    N = int(np.prod(orig_shape[:-2])) if len(orig_shape) > 2 else 1

    if eps is None:
        eps = float(jnp.finfo(x.dtype).eps)
    eps = float(eps)

    if N == 0:
        return x

    # ---- Lane-dense packing: make the lane dim a multiple of 128 ----
    g = math.gcd(D, 128)
    k = 128 // g
    if k > 1 and (N % k != 0 or k > 8):
        k = 1                                     # fallback: masked stores but correct
    Dlane = k * D
    rows = N // k
    x2 = x.reshape(rows, Dlane)

    # ---- Constants: per-segment blade mask (×1/C) and per-segment weights ----
    blade = np.zeros((16,), np.float32)
    blade[list(_INNER_BLADE_IDX)] = 1.0 / C       # channel-mean folded into the mask
    bm_row = np.tile(blade, C)                    # (D,)
    bmask_np = np.zeros((k, Dlane), np.float32)
    sel_np = np.zeros((k, Dlane), np.float32)
    for s in range(k):
        bmask_np[s, s * D:(s + 1) * D] = bm_row
        sel_np[s, s * D:(s + 1) * D] = 1.0
    bmask = jnp.asarray(bmask_np)

    # Weight/segment selector is only needed if there is a weight or if we must
    # scatter per-segment rsqrt values back to their lanes (k > 1).
    use_wsel = (weight is not None) or (k > 1)
    args = [x2, bmask]
    const_specs = [pl.BlockSpec((k, Dlane), lambda i: (0, 0))]
    if use_wsel:
        if weight is None:
            wsel = jnp.asarray(sel_np)
        else:
            w_lanes = jnp.tile(jnp.repeat(jnp.asarray(weight).astype(jnp.float32), 16), (k,))
            wsel = jnp.asarray(sel_np) * w_lanes[None, :]
        args.append(wsel)
        const_specs.append(pl.BlockSpec((k, Dlane), lambda i: (0, 0)))

    # ---- Tile sizing: ~4 MiB of input per block, sublane-aligned ----
    itemsize = np.dtype(x.dtype).itemsize
    sub = 16 if (itemsize <= 2 and rows >= 16) else 8   # bf16: packed sublane pairs
    row_bytes = Dlane * itemsize
    target_rows = max(sub, (target_block_bytes // row_bytes) // sub * sub)

    cores = _num_tensorcores()
    # Multi-TC (v7x): guarantee >=4 grid steps per core so the double buffer
    # overlaps and the ragged tail doesn't imbalance cores. Single-TC: one big
    # tile is strictly better (fewer ~0.35 µs per-step overheads).
    min_steps = 4 * cores if cores > 1 else 1
    cap_rows = _round_up(max(pl.cdiv(rows, min_steps), sub), sub)
    tn = int(min(target_rows, cap_rows))
    grid = (pl.cdiv(rows, tn),)                   # ragged tail handled by Pallas masking

    # 2x(in+out) double-buffered blocks + constants; raise above v5e's 16 MiB default.
    block_bytes = tn * Dlane * itemsize
    vmem_limit = int(max(32 << 20, 4 * block_bytes + (4 << 20)))

    nbytes_x = rows * Dlane * itemsize
    cost = pl.CostEstimate(
        flops=(5 + 2 * k) * rows * Dlane,
        transcendentals=rows * k,
        bytes_accessed=2 * nbytes_x + (2 if use_wsel else 1) * k * Dlane * 4,
    )

    if use_wsel:
        def kernel(x_ref, bmask_ref, wsel_ref, o_ref):
            _kernel_body(x_ref, bmask_ref, wsel_ref, o_ref, eps=eps, k=k)
    else:
        def kernel(x_ref, bmask_ref, o_ref):
            _kernel_body(x_ref, bmask_ref, None, o_ref, eps=eps, k=k)

    out = pl.pallas_call(
        kernel,
        out_shape=jax.ShapeDtypeStruct((rows, Dlane), x.dtype),
        grid_spec=pltpu.PrefetchScalarGridSpec(
            num_scalar_prefetch=0,
            grid=grid,
            in_specs=[pl.BlockSpec((tn, Dlane), lambda i: (i, 0))] + const_specs,
            out_specs=pl.BlockSpec((tn, Dlane), lambda i: (i, 0)),
        ),
        compiler_params=pltpu.CompilerParams(
            dimension_semantics=("parallel",),
            vmem_limit_bytes=vmem_limit,
        ),
        cost_estimate=cost,
    )(*args)

    return out.reshape(orig_shape)


def _reference(x, weight, eps):
    # Pure-JAX reference of equi_rms_norm semantics.
    if eps is None:
        eps = float(jnp.finfo(x.dtype).eps)
    mask = np.zeros((16,), dtype=np.float32)
    mask[list(_INNER_BLADE_IDX)] = 1.0
    xf = x.astype(jnp.float32)
    norm_sq = jnp.sum(xf * xf * jnp.asarray(mask), axis=-1)       # (..., C)
    ms = jnp.mean(norm_sq, axis=-1, keepdims=True)[..., None]     # (..., 1, 1)
    y = xf * lax.rsqrt(ms + eps)
    if weight is not None:
        y = y * weight.astype(jnp.float32)[..., :, None]
    return y.astype(x.dtype)


if __name__ == "__main__":
    key = jax.random.PRNGKey(0)
    batch, seq, in_channels = 2, 8, 4

    # 1) f32, module-default weights (ones) — packed lane-dense path (D=64 -> k=2).
    x = jax.random.normal(key, (batch, seq, in_channels, 16), dtype=jnp.float32)
    weight = jnp.ones((in_channels,), dtype=jnp.float32)
    out = jax.block_until_ready(equi_rms_norm_pallas(x, weight, None))
    np.testing.assert_allclose(np.asarray(out), np.asarray(_reference(x, weight, None)),
                               rtol=1e-5, atol=1e-5)

    k1, k2, k3, k4 = jax.random.split(key, 4)

    # 2) f32, non-trivial weights, ragged row count (exercises masked tail block).
    x_r = jax.random.normal(k1, (batch, 7, in_channels, 16), dtype=jnp.float32)
    w_r = jnp.linspace(0.5, 1.5, in_channels, dtype=jnp.float32)
    out_r = jax.block_until_ready(equi_rms_norm_pallas(x_r, w_r, None))
    np.testing.assert_allclose(np.asarray(out_r), np.asarray(_reference(x_r, w_r, None)),
                               rtol=1e-5, atol=1e-5)

    # 3) f32, channelwise_rescale=False, C=8 (D=128, no packing, weight elided).
    x_c8 = jax.random.normal(k2, (batch, seq, 8, 16), dtype=jnp.float32)
    out_c8 = jax.block_until_ready(equi_rms_norm_pallas(x_c8, None, None))
    np.testing.assert_allclose(np.asarray(out_c8), np.asarray(_reference(x_c8, None, None)),
                               rtol=1e-5, atol=1e-5)

    # 4) f32, channelwise_rescale=False with packing (C=4 -> selector-only wsel).
    x_nw = jax.random.normal(k3, (batch, seq, in_channels, 16), dtype=jnp.float32)
    out_nw = jax.block_until_ready(equi_rms_norm_pallas(x_nw, None, None))
    np.testing.assert_allclose(np.asarray(out_nw), np.asarray(_reference(x_nw, None, None)),
                               rtol=1e-5, atol=1e-5)

    # 5) bf16 inputs: f32 compute, single cast at the store.
    x_b = jax.random.normal(k4, (batch, seq, in_channels, 16), dtype=jnp.float32).astype(jnp.bfloat16)
    w_b = jnp.linspace(0.75, 1.25, in_channels, dtype=jnp.float32).astype(jnp.bfloat16)
    out_b = jax.block_until_ready(equi_rms_norm_pallas(x_b, w_b, None))
    ref_b = _reference(x_b, w_b, None)
    np.testing.assert_allclose(np.asarray(out_b, dtype=np.float32),
                               np.asarray(ref_b, dtype=np.float32),
                               rtol=2e-2, atol=2e-2)

    print("KERNEL_OK")
</pallas_src>

<mosaic_0001>
module attributes {stable_mosaic.version = 11 : i64} {
  func.func @kernel(%arg0: i32, %arg1: memref<8x128xf32, #tpu.memory_space<vmem>>, %arg2: memref<2x128xf32, #tpu.memory_space<vmem>>, %arg3: memref<2x128xf32, #tpu.memory_space<vmem>>, %arg4: memref<8x128xf32, #tpu.memory_space<vmem>>) attributes {dimension_semantics = [#tpu.dimension_semantics<parallel>], iteration_bounds = array<i64: 1>, scalar_prefetch = 0 : i64, scratch_operands = 0 : i64, tpu.core_type = #tpu.core_type<tc>, window_params = [{transform_indices = @transform_0, window_bounds = array<i64: 8, 128>}, {pipeline_mode = #tpu.pipeline_mode<synchronous>, transform_indices = @transform_1, window_bounds = array<i64: 2, 128>}, {pipeline_mode = #tpu.pipeline_mode<synchronous>, transform_indices = @transform_2, window_bounds = array<i64: 2, 128>}, {transform_indices = @transform_3, window_bounds = array<i64: 8, 128>}]} {
    %c0 = arith.constant 0 : index
    %c0_0 = arith.constant 0 : index
    %0 = vector.load %arg1[%c0, %c0_0] : memref<8x128xf32, #tpu.memory_space<vmem>>, vector<8x128xf32>
    %1 = arith.mulf %0, %0 : vector<8x128xf32>
    %c0_1 = arith.constant 0 : index
    %c0_2 = arith.constant 0 : index
    %2 = vector.load %arg2[%c0_1, %c0_2] : memref<2x128xf32, #tpu.memory_space<vmem>>, vector<2x128xf32>
    %c0_3 = arith.constant 0 : index
    %c0_4 = arith.constant 0 : index
    %3 = vector.load %arg3[%c0_3, %c0_4] : memref<2x128xf32, #tpu.memory_space<vmem>>, vector<2x128xf32>
    %4 = vector.extract_strided_slice %2 {offsets = [0, 0], sizes = [1, 128], strides = [1, 1]} : vector<2x128xf32> to vector<1x128xf32>
    %5 = vector.broadcast %4 : vector<1x128xf32> to vector<8x128xf32>
    %6 = arith.mulf %1, %5 : vector<8x128xf32>
    %cst = arith.constant dense<0.000000e+00> : vector<8xf32>
    %7 = vector.multi_reduction <add>, %6, %cst [1] : vector<8x128xf32> to vector<8xf32>
    %8 = vector.shape_cast %7 : vector<8xf32> to vector<8x1xf32>
    %cst_5 = arith.constant 1.1920929E-7 : f32
    %9 = vector.broadcast %cst_5 : f32 to vector<8x1xf32>
    %10 = arith.addf %8, %9 : vector<8x1xf32>
    %11 = math.rsqrt %10 : vector<8x1xf32>
    %12 = vector.extract_strided_slice %3 {offsets = [0, 0], sizes = [1, 128], strides = [1, 1]} : vector<2x128xf32> to vector<1x128xf32>
    %13 = vector.broadcast %11 : vector<8x1xf32> to vector<8x128xf32>
    %14 = vector.broadcast %12 : vector<1x128xf32> to vector<8x128xf32>
    %15 = arith.mulf %13, %14 : vector<8x128xf32>
    %16 = vector.extract_strided_slice %2 {offsets = [1, 0], sizes = [1, 128], strides = [1, 1]} : vector<2x128xf32> to vector<1x128xf32>
    %17 = vector.broadcast %16 : vector<1x128xf32> to vector<8x128xf32>
    %18 = arith.mulf %1, %17 : vector<8x128xf32>
    %cst_6 = arith.constant dense<0.000000e+00> : vector<8xf32>
    %19 = vector.multi_reduction <add>, %18, %cst_6 [1] : vector<8x128xf32> to vector<8xf32>
    %20 = vector.shape_cast %19 : vector<8xf32> to vector<8x1xf32>
    %cst_7 = arith.constant 1.1920929E-7 : f32
    %21 = vector.broadcast %cst_7 : f32 to vector<8x1xf32>
    %22 = arith.addf %20, %21 : vector<8x1xf32>
    %23 = math.rsqrt %22 : vector<8x1xf32>
    %24 = vector.extract_strided_slice %3 {offsets = [1, 0], sizes = [1, 128], strides = [1, 1]} : vector<2x128xf32> to vector<1x128xf32>
    %25 = vector.broadcast %23 : vector<8x1xf32> to vector<8x128xf32>
    %26 = vector.broadcast %24 : vector<1x128xf32> to vector<8x128xf32>
    %27 = arith.mulf %25, %26 : vector<8x128xf32>
    %28 = arith.addf %15, %27 : vector<8x128xf32>
    %29 = arith.mulf %0, %28 : vector<8x128xf32>
    %c0_8 = arith.constant 0 : index
    %c0_9 = arith.constant 0 : index
    %30 = vector.load %arg4[%c0_8, %c0_9] : memref<8x128xf32, #tpu.memory_space<vmem>>, vector<8x128xf32>
    tpu.vector_store %arg4[%c0_8, %c0_9], %29 {strides = array<i32>} : memref<8x128xf32, #tpu.memory_space<vmem>>, vector<8x128xf32>,
    return
  }
  func.func @transform_0(%arg0: i32) -> (i32, i32) {
    %c0_i32 = arith.constant 0 : i32
    %c0_i32_0 = arith.constant 0 : i32
    return %arg0, %c0_i32 : i32, i32
  }
  func.func @transform_1(%arg0: i32) -> (i32, i32) {
    %c0_i32 = arith.constant 0 : i32
    %c0_i32_0 = arith.constant 0 : i32
    %c0_i32_1 = arith.constant 0 : i32
    return %c0_i32, %c0_i32_0 : i32, i32
  }
  func.func @transform_2(%arg0: i32) -> (i32, i32) {
    %c0_i32 = arith.constant 0 : i32
    %c0_i32_0 = arith.constant 0 : i32
    %c0_i32_1 = arith.constant 0 : i32
    return %c0_i32, %c0_i32_0 : i32, i32
  }
  func.func @transform_3(%arg0: i32) -> (i32, i32) {
    %c0_i32 = arith.constant 0 : i32
    %c0_i32_0 = arith.constant 0 : i32
    return %arg0, %c0_i32 : i32, i32
  }
}

</mosaic_0001>

<llo_original>
// kernel: tpu_custom_call.1
$region0: #{tpu_custom_call.1}
  #allocation0 [shape = 'u32[]', space=smem, size = 0x4, offset = 0x4, fixed_abs, tag = 'smem constant byte address 0x4 - core index']
  #allocation1 [shape = 'u32[144,128]{1,0:T(1,128)}', space=vmem, size = 0x12000, scoped, tag = 'internal scratch']
  %s0 = inlined_call_operand.hbm [shape: f32[8,128], index: 0, kind: input, shape index: {}]
  %s1 = inlined_call_operand.vmem [shape: f32[2,128], index: 1, kind: input, shape index: {}]
  %s2 = inlined_call_operand.vmem [shape: f32[2,128], index: 2, kind: input, shape index: {}]
  %s3 = inlined_call_operand.hbm [shape: f32[8,128], index: 3, kind: output, shape index: {}]
  %s4 = sld [smem:[#allocation0]]
  $region26: #{tpu_custom_call.1} parent=0
    _
  %s6 = ssub.s32 1, %s4
  %s7 = scalar_select 0, %s6, %s4
  $region1: #{tpu_custom_call.1} parent=0
    #allocation2 [shape = 'u8[4096]{0}', space=vmem, size = 0x1000, scoped, tag = 'input window, operand 0, single buffered']
    #allocation3 [shape = 's32[1]{0}', space=sflag, size = 0x4, scoped, tag = 'scoped memory for tpu_custom_call.1']
    #allocation4 [shape = 's32[1]{0}', space=sflag, size = 0x4, scoped, tag = 'scoped memory for tpu_custom_call.1']
    #allocation5 [shape = 'u8[4096]{0}', space=vmem, size = 0x1000, scoped, tag = 'output window, operand 0, single buffered']
    %8 = vsyncpa [#allocation3], 0
    %9 = vsyncpa [#allocation4], 0
    // Predicated region
    $region2: #{tpu_custom_call.1} parent=1 // pred_check
      _
    $region3: #{tpu_custom_call.1} parent=1 // pred_check_branch
      %11 = sbr.rel (0) target = $region5
    $region4: #{tpu_custom_call.1} parent=1 // pred_region
      %s13 = ssub.s32 128, 128
      %14 = vsyncadd [#allocation3], %s13
      %s16 = sshll.u32 [#allocation2], 4
      %s17 = int_to_ptr.vmem [resolvable:$true] %s16
      %19 = dma.hbm_to_vmem [thread:$0]  %s0, 128, %s17, [#allocation3]
    $region5: #{tpu_custom_call.1} parent=1 // pred_fallthru
      _
    // Predicated region
    $region6: #{tpu_custom_call.1} parent=1 // pred_check
      _
    $region7: #{tpu_custom_call.1} parent=1 // pred_check_branch
      %21 = sbr.rel (0) target = $region9
    $region8: #{tpu_custom_call.1} parent=1 // pred_region
      _
    $region9: #{tpu_custom_call.1} parent=1 // pred_fallthru
      _
    // Predicated region
    $region10: #{tpu_custom_call.1} parent=1 // pred_check
      _
    $region11: #{tpu_custom_call.1} parent=1 // pred_check_branch
      %23 = sbr.rel (0) target = $region13
    $region12: #{tpu_custom_call.1} parent=1 // pred_region
      _
    $region13: #{tpu_custom_call.1} parent=1 // pred_fallthru
      _
    // Predicated region
    $region14: #{tpu_custom_call.1} parent=1 // pred_check
      _
    $region15: #{tpu_custom_call.1} parent=1 // pred_check_branch
      %25 = sbr.rel (0) target = $region17
    $region16: #{tpu_custom_call.1} parent=1 // pred_region
      %26 = dma.done [#allocation3], 128
    $region17: #{tpu_custom_call.1} parent=1 // pred_fallthru
      _
    %v27 = vld [vmem:[#allocation2] sm:$0xff]
    %v28 = vmul.f32 %v27, %v27
    %v29 = vld [vmem:[%s1] sm:$0x3]
    %v30 = vld [vmem:[%s2] sm:$0x3]
    %v31 = vlaneseq
    %v32 = vshrl.u32 %v31, 7
    %v33 = vsub.s32 0, %v32
    %v34 = vrot.slane %v29, %v33
    %v35 = vmul.f32 %v28, %v34
    %36 = vadd.xlane.f32.xlu0 %v35
    %v37 = vpop.xlane.xlu0 %36
    %v38 = vadd.f32 %v37, 1.1920929e-07
    %v39 = vrsqrt.pop %v38
    %v40 = vlaneseq
    %v41 = vshrl.u32 %v40, 7
    %v42 = vsub.s32 0, %v41
    %v43 = vrot.slane %v30, %v42
    %v44 = vmul.f32 %v39, %v43
    %v45 = vlaneseq
    %v46 = vshrl.u32 %v45, 7
    %v47 = vsub.s32 1, %v46
    %v48 = vrot.slane %v29, %v47
    %v49 = vmul.f32 %v28, %v48
    %50 = vadd.xlane.f32.xlu0 %v49
    %v51 = vpop.xlane.xlu0 %50
    %v52 = vadd.f32 %v51, 1.1920929e-07
    %v53 = vrsqrt.pop %v52
    %v54 = vlaneseq
    %v55 = vshrl.u32 %v54, 7
    %v56 = vsub.s32 1, %v55
    %v57 = vrot.slane %v30, %v56
    %v58 = vmul.f32 %v53, %v57
    %v59 = vadd.f32 %v44, %v58
    %v60 = vmul.f32 %v27, %v59
    %61 = vst [vmem:[#allocation5] sm:$0xff] %v60
    // Predicated region
    $region18: #{tpu_custom_call.1} parent=1 // pred_check
      _
    $region19: #{tpu_custom_call.1} parent=1 // pred_check_branch
      %63 = sbr.rel (0) target = $region21
    $region20: #{tpu_custom_call.1} parent=1 // pred_region
      %s65 = ssub.s32 128, 128
      %66 = vsyncadd [#allocation4], %s65
      %s68 = sshll.u32 [#allocation5], 4
      %s69 = int_to_ptr.vmem [resolvable:$true] %s68
      %71 = dma.vmem_to_hbm [thread:$0]  %s69, 128, %s3, [#allocation4]
    $region21: #{tpu_custom_call.1} parent=1 // pred_fallthru
      _
    // Predicated region
    $region22: #{tpu_custom_call.1} parent=1 // pred_check
      _
    $region23: #{tpu_custom_call.1} parent=1 // pred_check_branch
      %73 = sbr.rel (0) target = $region25
    $region24: #{tpu_custom_call.1} parent=1 // pred_region
      %74 = dma.done [#allocation4], 128
    $region25: #{tpu_custom_call.1} parent=1 // pred_fallthru
      _
    %75 = vsyncpa [#allocation3], 1
    %76 = vsyncpa [#allocation4], 1

</llo_original>
